<compile_context>
chip_gen: v5e
topology: v5e:2x2
jax: 0.10.0
libtpu: 0.0.40
codegen_flags: <defaults>
</compile_context>

<pallas_src>
import jax
import jax.numpy as jnp
import numpy as np
from jax import lax
from jax.experimental import pallas as pl
from jax.experimental.pallas import tpu as pltpu


def tirg_kernel(scale_ref, f1_ref, f2_ref, loss_ref):
    # scale_ref: (1, 1) learnable normalization scale in SMEM (init 4.0)
    # f1_ref, f2_ref: (B, D) query / target features in VMEM
    # loss_ref: (1, 1) scalar cross-entropy loss
    B = f1_ref.shape[0]
    scale = scale_ref[0, 0]

    f1 = f1_ref[...].astype(jnp.float32)
    f2 = f2_ref[...].astype(jnp.float32)

    # Unit-normalize rows with a single rsqrt each (EUP); the learnable scale
    # is folded into one post-matmul scalar multiply (scale^2).
    inv1 = lax.rsqrt(jnp.sum(f1 * f1, axis=1, keepdims=True))   # (B, 1)
    inv2 = lax.rsqrt(jnp.sum(f2 * f2, axis=1, keepdims=True))   # (B, 1)
    q = f1 * inv1
    t = f2 * inv2

    # Similarity logits on the MXU: contract D of both operands (NT layout,
    # no explicit transpose of t).
    sim = lax.dot_general(q, t, (((1,), (1,)), ((), ())),
                          preferred_element_type=jnp.float32)   # (B, B)
    scale2 = scale * scale
    logits = scale2 * sim

    # Diagonal logits directly: logits[i, i] == scale^2 * (q[i] . t[i]).
    diag = scale2 * jnp.sum(q * t, axis=1, keepdims=True)       # (B, 1)

    # Cross entropy with labels = arange(B):
    #   loss_i = logsumexp(logits[i, :]) - logits[i, i]
    m = jnp.max(logits, axis=1, keepdims=True)                  # (B, 1)
    lse = m + jnp.log(jnp.sum(jnp.exp(logits - m), axis=1, keepdims=True))

    per_example = lse - diag                                    # (B, 1)
    # Mean over batch with a compile-time reciprocal (no runtime divide).
    loss_ref[...] = jnp.sum(per_example, keepdims=True) * jnp.float32(1.0 / B)


def tirg_criterion(f1, f2, scale):
    """Pallas-backed TIRG batch-based classification loss. Returns a scalar."""
    B, D = f1.shape
    assert f2.shape == (B, D)
    scale_arr = jnp.full((1, 1), scale, dtype=jnp.float32)

    loss = pl.pallas_call(
        tirg_kernel,
        out_shape=jax.ShapeDtypeStruct((1, 1), jnp.float32),
        in_specs=[
            pl.BlockSpec(memory_space=pltpu.MemorySpace.SMEM),  # scalar scale
            pl.BlockSpec(memory_space=pltpu.MemorySpace.VMEM),  # f1 (whole)
            pl.BlockSpec(memory_space=pltpu.MemorySpace.VMEM),  # f2 (whole)
        ],
        out_specs=pl.BlockSpec(memory_space=pltpu.MemorySpace.VMEM),
    )(scale_arr, f1, f2)
    return loss[0, 0]


def tirg_criterion_ref(f1, f2, scale):
    """Pure-JAX reference for validation."""
    f1 = f1.astype(jnp.float32)
    f2 = f2.astype(jnp.float32)
    q = scale * f1 / jnp.linalg.norm(f1, axis=1, keepdims=True)
    t = scale * f2 / jnp.linalg.norm(f2, axis=1, keepdims=True)
    logits = q @ t.T
    labels = jnp.arange(logits.shape[0])
    logp = jax.nn.log_softmax(logits, axis=1)
    return -jnp.mean(logp[jnp.arange(logits.shape[0]), labels])


if __name__ == "__main__":
    # Deterministic parameter init: normalize_scale=4.0 (learn_scale=True,
    # but this is a synthetic forward pass, so it stays at its init value).
    normalize_scale = 4.0

    key = jax.random.PRNGKey(0)
    k1, k2 = jax.random.split(key)
    B, D = 8, 128  # small batch of feature vectors (query / target embeddings)
    f1 = jax.random.normal(k1, (B, D), dtype=jnp.float32)
    f2 = jax.random.normal(k2, (B, D), dtype=jnp.float32)

    loss = jax.block_until_ready(tirg_criterion(f1, f2, normalize_scale))
    ref = jax.block_until_ready(tirg_criterion_ref(f1, f2, normalize_scale))

    assert np.allclose(np.asarray(loss), np.asarray(ref), rtol=1e-4, atol=1e-4), (
        loss, ref)
    print("KERNEL_OK")
</pallas_src>

<mosaic_0001>
module attributes {stable_mosaic.version = 11 : i64} {
  func.func @tirg_kernel(%arg0: memref<1x1xf32, #tpu.memory_space<smem>>, %arg1: memref<8x128xf32, #tpu.memory_space<vmem>>, %arg2: memref<8x128xf32, #tpu.memory_space<vmem>>, %arg3: memref<1x1xf32, #tpu.memory_space<vmem>>) attributes {dimension_semantics = [], scalar_prefetch = 0 : i64, scratch_operands = 0 : i64, tpu.core_type = #tpu.core_type<tc>} {
    %c0 = arith.constant 0 : index
    %c0_0 = arith.constant 0 : index
    %0 = memref.load %arg0[%c0, %c0_0] : memref<1x1xf32, #tpu.memory_space<smem>>
    %c0_1 = arith.constant 0 : index
    %c0_2 = arith.constant 0 : index
    %1 = vector.load %arg1[%c0_1, %c0_2] : memref<8x128xf32, #tpu.memory_space<vmem>>, vector<8x128xf32>
    %c0_3 = arith.constant 0 : index
    %c0_4 = arith.constant 0 : index
    %2 = vector.load %arg2[%c0_3, %c0_4] : memref<8x128xf32, #tpu.memory_space<vmem>>, vector<8x128xf32>
    %3 = arith.mulf %1, %1 : vector<8x128xf32>
    %cst = arith.constant dense<0.000000e+00> : vector<8xf32>
    %4 = vector.multi_reduction <add>, %3, %cst [1] : vector<8x128xf32> to vector<8xf32>
    %5 = vector.shape_cast %4 : vector<8xf32> to vector<8x1xf32>
    %6 = math.rsqrt %5 : vector<8x1xf32>
    %7 = arith.mulf %2, %2 : vector<8x128xf32>
    %cst_5 = arith.constant dense<0.000000e+00> : vector<8xf32>
    %8 = vector.multi_reduction <add>, %7, %cst_5 [1] : vector<8x128xf32> to vector<8xf32>
    %9 = vector.shape_cast %8 : vector<8xf32> to vector<8x1xf32>
    %10 = math.rsqrt %9 : vector<8x1xf32>
    %11 = vector.broadcast %6 : vector<8x1xf32> to vector<8x128xf32>
    %12 = arith.mulf %1, %11 : vector<8x128xf32>
    %13 = vector.broadcast %10 : vector<8x1xf32> to vector<8x128xf32>
    %14 = arith.mulf %2, %13 : vector<8x128xf32>
    %cst_6 = arith.constant dense<0.000000e+00> : vector<8x8xf32>
    %15 = tpu.matmul %12, %14, %cst_6 {dimension_numbers = #tpu.dot_dimension_numbers<[1], [1], [0], [0], [0, 0, 1, 0], [], []>} : vector<8x128xf32>, vector<8x128xf32>, vector<8x8xf32> -> vector<8x8xf32>
    %16 = arith.mulf %0, %0 : f32
    %17 = vector.broadcast %16 : f32 to vector<8x8xf32>
    %18 = arith.mulf %17, %15 : vector<8x8xf32>
    %19 = arith.mulf %12, %14 : vector<8x128xf32>
    %cst_7 = arith.constant dense<0.000000e+00> : vector<8xf32>
    %20 = vector.multi_reduction <add>, %19, %cst_7 [1] : vector<8x128xf32> to vector<8xf32>
    %21 = vector.shape_cast %20 : vector<8xf32> to vector<8x1xf32>
    %22 = vector.broadcast %16 : f32 to vector<8x1xf32>
    %23 = arith.mulf %22, %21 : vector<8x1xf32>
    %cst_8 = arith.constant dense<0xFF800000> : vector<8xf32>
    %24 = vector.multi_reduction <maximumf>, %18, %cst_8 [1] : vector<8x8xf32> to vector<8xf32>
    %25 = vector.shape_cast %24 : vector<8xf32> to vector<8x1xf32>
    %26 = vector.broadcast %25 : vector<8x1xf32> to vector<8x8xf32>
    %27 = arith.subf %18, %26 : vector<8x8xf32>
    %28 = math.exp %27 : vector<8x8xf32>
    %cst_9 = arith.constant dense<0.000000e+00> : vector<8xf32>
    %29 = vector.multi_reduction <add>, %28, %cst_9 [1] : vector<8x8xf32> to vector<8xf32>
    %30 = vector.shape_cast %29 : vector<8xf32> to vector<8x1xf32>
    %31 = math.log %30 : vector<8x1xf32>
    %32 = arith.addf %25, %31 : vector<8x1xf32>
    %33 = arith.subf %32, %23 : vector<8x1xf32>
    %34 = vector.shape_cast %33 : vector<8x1xf32> to vector<1x8x1xf32>
    %cst_10 = arith.constant dense<0.000000e+00> : vector<1xf32>
    %35 = vector.multi_reduction <add>, %34, %cst_10 [1, 2] : vector<1x8x1xf32> to vector<1xf32>
    %36 = vector.shape_cast %35 : vector<1xf32> to vector<1x1x1xf32>
    %37 = vector.extract %36[0, 0, 0] : f32 from vector<1x1x1xf32>
    %38 = vector.broadcast %37 : f32 to vector<1x1xf32>
    %cst_11 = arith.constant 1.250000e-01 : f32
    %39 = vector.broadcast %cst_11 : f32 to vector<1x1xf32>
    %40 = arith.mulf %38, %39 : vector<1x1xf32>
    %c0_12 = arith.constant 0 : index
    %c0_13 = arith.constant 0 : index
    %41 = vector.load %arg3[%c0_12, %c0_13] : memref<1x1xf32, #tpu.memory_space<vmem>>, vector<1x1xf32>
    tpu.vector_store %arg3[%c0_12, %c0_13], %40 {strides = array<i32>} : memref<1x1xf32, #tpu.memory_space<vmem>>, vector<1x1xf32>,
    return
  }
}

</mosaic_0001>

<llo_original>
// kernel: tpu_custom_call.1
$region0: #{tpu_custom_call.1}
  #allocation0 [shape = 'u32[]', space=smem, size = 0x4, offset = 0x4, fixed_abs, tag = 'smem constant byte address 0x4 - core index']
  #allocation1 [shape = 'u32[72,128]{1,0:T(1,128)}', space=vmem, size = 0x9000, scoped, tag = 'internal scratch']
  #allocation2 [shape = 'f32[1,1]{1,0:T(1,128)S(6)}', space=smem, size = 0x200, scoped, tag = 'scoped memory for tpu_custom_call.1']
  %s0 = inlined_call_operand.<no memory space> [shape: f32[1,1], index: 0, kind: input, shape index: {}]
  %s1 = inlined_call_operand.hbm [shape: f32[8,128], index: 1, kind: input, shape index: {}]
  %s2 = inlined_call_operand.hbm [shape: f32[8,128], index: 2, kind: input, shape index: {}]
  %s3 = inlined_call_operand.hbm [shape: f32[1,1], index: 3, kind: output, shape index: {}]
  %s4 = sld [smem:[#allocation0]]
  $region30: #{tpu_custom_call.1} parent=0
    _
  %s6 = ssub.s32 1, %s4
  %s7 = scalar_select 0, %s6, %s4
  %8 = sst [smem:[#allocation2]] %s0
  $region1: #{tpu_custom_call.1} parent=0
    #allocation3 [shape = 'u8[4096]{0}', space=vmem, size = 0x1000, scoped, tag = 'input window, operand 1, single buffered']
    #allocation4 [shape = 's32[1]{0}', space=sflag, size = 0x4, scoped, tag = 'scoped memory for tpu_custom_call.1']
    #allocation5 [shape = 's32[1]{0}', space=sflag, size = 0x4, scoped, tag = 'scoped memory for tpu_custom_call.1']
    #allocation6 [shape = 'u8[4096]{0}', space=vmem, size = 0x1000, scoped, tag = 'input window, operand 2, single buffered']
    #allocation7 [shape = 's32[1]{0}', space=sflag, size = 0x4, scoped, tag = 'scoped memory for tpu_custom_call.1']
    #allocation8 [shape = 'u8[512]{0}', space=vmem, size = 0x400, scoped, tag = 'output window, operand 0, single buffered']
    %9 = vsyncpa [#allocation4], 0
    %10 = vsyncpa [#allocation7], 0
    %11 = vsyncpa [#allocation5], 0
    // Predicated region
    $region2: #{tpu_custom_call.1} parent=1 // pred_check
      _
    $region3: #{tpu_custom_call.1} parent=1 // pred_check_branch
      %13 = sbr.rel (0) target = $region5
    $region4: #{tpu_custom_call.1} parent=1 // pred_region
      _
    $region5: #{tpu_custom_call.1} parent=1 // pred_fallthru
      _
    // Predicated region
    $region6: #{tpu_custom_call.1} parent=1 // pred_check
      _
    $region7: #{tpu_custom_call.1} parent=1 // pred_check_branch
      %15 = sbr.rel (0) target = $region9
    $region8: #{tpu_custom_call.1} parent=1 // pred_region
      %17 = vsyncadd [#allocation4], 0
      %s19 = sshll.u32 %s1, 4
      %s20 = int_to_ptr.hbm [resolvable:$true] %s19
      %s21 = sshll.u32 [#allocation3], 4
      %s22 = int_to_ptr.vmem [resolvable:$true] %s21
      %24 = dma.hbm_to_vmem [thread:$0]  %s20, 128, %s22, [#allocation4]
    $region9: #{tpu_custom_call.1} parent=1 // pred_fallthru
      _
    // Predicated region
    $region10: #{tpu_custom_call.1} parent=1 // pred_check
      _
    $region11: #{tpu_custom_call.1} parent=1 // pred_check_branch
      %26 = sbr.rel (0) target = $region13
    $region12: #{tpu_custom_call.1} parent=1 // pred_region
      %28 = vsyncadd [#allocation7], 0
      %s30 = sshll.u32 %s2, 4
      %s31 = int_to_ptr.hbm [resolvable:$true] %s30
      %s32 = sshll.u32 [#allocation6], 4
      %s33 = int_to_ptr.vmem [resolvable:$true] %s32
      %35 = dma.hbm_to_vmem [thread:$0]  %s31, 128, %s33, [#allocation7]
    $region13: #{tpu_custom_call.1} parent=1 // pred_fallthru
      _
    // Predicated region
    $region14: #{tpu_custom_call.1} parent=1 // pred_check
      _
    $region15: #{tpu_custom_call.1} parent=1 // pred_check_branch
      %37 = sbr.rel (0) target = $region17
    $region16: #{tpu_custom_call.1} parent=1 // pred_region
      %39 = dma.done [#allocation4], 128
    $region17: #{tpu_custom_call.1} parent=1 // pred_fallthru
      _
    // Predicated region
    $region18: #{tpu_custom_call.1} parent=1 // pred_check
      _
    $region19: #{tpu_custom_call.1} parent=1 // pred_check_branch
      %41 = sbr.rel (0) target = $region21
    $region20: #{tpu_custom_call.1} parent=1 // pred_region
      %43 = dma.done [#allocation7], 128
    $region21: #{tpu_custom_call.1} parent=1 // pred_fallthru
      _
    %s44 = sld [smem:[#allocation2]]
    %v45 = vld [vmem:[#allocation3] sm:$0xff]
    %v46 = vld [vmem:[#allocation6] sm:$0xff]
    %v47 = vmul.f32 %v45, %v45
    %48 = vadd.xlane.f32.xlu0 %v47
    %v49 = vpop.xlane.xlu0 %48
    %v50 = vrsqrt.pop %v49
    %v51 = vmul.f32 %v50, %v49
    %v52 = vmul.f32 %v51, %v50
    %v53 = vmul.f32 0.5, %v52
    %v54 = vsub.f32 1.5, %v53
    %v55 = vmul.f32 %v50, %v54
    %vm56 = vweird.f32 %v49
    %vm57 = vweird.f32 %v50
    %vm58 = vmor %vm56, %vm57
    %v59 = vsel %vm58, %v50, %v55
    %v60 = vmul.f32 %v46, %v46
    %61 = vadd.xlane.f32.xlu0 %v60
    %v62 = vpop.xlane.xlu0 %61
    %v63 = vrsqrt.pop %v62
    %v64 = vmul.f32 %v63, %v62
    %v65 = vmul.f32 %v64, %v63
    %v66 = vmul.f32 0.5, %v65
    %v67 = vsub.f32 1.5, %v66
    %v68 = vmul.f32 %v63, %v67
    %vm69 = vweird.f32 %v62
    %vm70 = vweird.f32 %v63
    %vm71 = vmor %vm69, %vm70
    %v72 = vsel %vm71, %v63, %v68
    %v73 = vmul.f32 %v45, %v59
    %v74 = vmul.f32 %v46, %v72
    %75 = vmatpush.xpose.msra.mxu0 0.0
    %76 = vmatpush.xpose.msra.mxu0 0.0
    %77 = vmatpush.xpose.msra.mxu0 0.0
    %78 = vmatpush.xpose.msra.mxu0 0.0
    %79 = vmatpush.xpose.msra.mxu0 0.0
    %80 = vmatpush.xpose.msra.mxu0 0.0
    %81 = vmatpush.xpose.msra.mxu0 0.0
    %82 = vmatpush.xpose.msra.mxu0 0.0
    %83 = vmatpush.xpose.msra.mxu0 0.0
    %84 = vmatpush.xpose.msra.mxu0 0.0
    %85 = vmatpush.xpose.msra.mxu0 0.0
    %86 = vmatpush.xpose.msra.mxu0 0.0
    %87 = vmatpush.xpose.msra.mxu0 0.0
    %88 = vmatpush.xpose.msra.mxu0 0.0
    %89 = vmatpush.xpose.msra.mxu0 0.0
    %90 = vmatpush.xpose.msra.mxu0 %v74
    %91 = vmatmul.f32.gmra.mxu0 %v73
    %v92 = vpop.f32.mrf.mxu0
    %v93 = vadd.f32 0.0, %v92
    %94 = vdwg.mxu0
    %s95 = smul.f32 %s44, %s44
    %v96 = vstv %s95
    %v97 = vmul.f32 %v96, %v93
    %v98 = vmul.f32 %v73, %v74
    %99 = vadd.xlane.f32.xlu0 %v98
    %v100 = vpop.xlane.xlu0 %99
    %v101 = vmul.f32 %v96, %v100
    %vm102 = vcmask 64512
    %v103 = vsel %vm102, %v97, -inf
    %104 = vmax.xlane.f32.xlu0 %v103
    %v105 = vpop.xlane.xlu0 %104
    %v106 = vsub.f32 %v97, %v105
    %v107 = vmul.f32 %v106, 1.442695
    %v108 = vpow.pop %v107
    %v109 = vsel %vm102, %v108, 0.0
    %110 = vadd.xlane.f32.xlu0 %v109
    %v111 = vpop.xlane.xlu0 %110
    %v112 = vlog2.pop %v111
    %v113 = vmul.f32 %v112, 0.6931472
    %v114 = vadd.f32 %v105, %v113
    %v115 = vsub.f32 %v114, %v101
    %vm116 = vcmask 7168
    %v117 = vsel %vm116, %v115, 0.0
    %118 = vadd.xlane.f32.xlu0 %v117
    %v119 = vpop.xlane.xlu0 %118
    %v120 = vrot.slane %v119, 4
    %v121 = vadd.f32 %v119, %v120
    %v122 = vrot.slane %v121, 2
    %v123 = vadd.f32 %v121, %v122
    %v124 = vrot.slane %v123, 1
    %v125 = vadd.f32 %v123, %v124
    %s126 = vtos %v125
    %v127 = vstv %s126
    %v128 = vmul.f32 %v127, 0.125
    %vm129 = vcmask 0
    %130 = vst.msk [vmem:[#allocation8] sm:$0x1] %vm129, %v128
    // Predicated region
    $region22: #{tpu_custom_call.1} parent=1 // pred_check
      _
    $region23: #{tpu_custom_call.1} parent=1 // pred_check_branch
      %132 = sbr.rel (0) target = $region25
    $region24: #{tpu_custom_call.1} parent=1 // pred_region
      %134 = vsyncadd [#allocation5], 0
      %s136 = sshll.u32 [#allocation8], 4
      %s137 = int_to_ptr.vmem [resolvable:$true] %s136
      %s138 = sshll.u32 %s3, 4
      %s139 = int_to_ptr.hbm [resolvable:$true] %s138
      %141 = dma.vmem_to_hbm [thread:$0]  %s137, 16, %s139, [#allocation5]
    $region25: #{tpu_custom_call.1} parent=1 // pred_fallthru
      _
    // Predicated region
    $region26: #{tpu_custom_call.1} parent=1 // pred_check
      _
    $region27: #{tpu_custom_call.1} parent=1 // pred_check_branch
      %143 = sbr.rel (0) target = $region29
    $region28: #{tpu_custom_call.1} parent=1 // pred_region
      %145 = dma.done [#allocation5], 16
    $region29: #{tpu_custom_call.1} parent=1 // pred_fallthru
      _
    %146 = vsyncpa [#allocation4], 1
    %147 = vsyncpa [#allocation7], 1
    %148 = vsyncpa [#allocation5], 1

</llo_original>
